<compile_context>
chip_gen: v7x
topology: tpu7x:2x2x1
jax: 0.10.0
libtpu: 0.0.40
codegen_flags: <defaults>
</compile_context>

<pallas_src>
import jax
import jax.numpy as jnp
from jax.experimental import pallas as pl
from jax.experimental.pallas import tpu as pltpu


def mlp_kernel(p_ref, x_ref, o_ref):
    """p_ref: SMEM (13,) f32 packed params.  x_ref/o_ref: VMEM (TR, TC) f32
    slabs holding batch elements on sublanes+lanes.  Pure VPU FMAs (no MXU)."""
    # Hoist the 13 scalar params into locals once per grid step so each
    # scalar->vector broadcast happens exactly once.
    w1_0 = p_ref[0]
    w1_1 = p_ref[1]
    b1_0 = p_ref[2]
    b1_1 = p_ref[3]
    w2_00 = p_ref[4]
    w2_01 = p_ref[5]
    w2_10 = p_ref[6]
    w2_11 = p_ref[7]
    b2_0 = p_ref[8]
    b2_1 = p_ref[9]
    w3_0 = p_ref[10]
    w3_1 = p_ref[11]
    b3 = p_ref[12]

    x = x_ref[...]                                             # (TR, TC)

    # Layer 1: Linear(1, 2) + ReLU
    h1_0 = jnp.maximum(x * w1_0 + b1_0, 0.0)
    h1_1 = jnp.maximum(x * w1_1 + b1_1, 0.0)

    # Layer 2: Linear(2, 2) + ReLU   (weights stored (in, out) row-major)
    h2_0 = jnp.maximum(h1_0 * w2_00 + h1_1 * w2_10 + b2_0, 0.0)
    h2_1 = jnp.maximum(h1_0 * w2_01 + h1_1 * w2_11 + b2_1, 0.0)

    # Layer 3: Linear(2, 1)
    o_ref[...] = h2_0 * w3_0 + h2_1 * w3_1 + b3


def _round_up(a, m):
    return (a + m - 1) // m * m


def reference_forward(x, params):
    """Plain fused-XLA forward (also the small-batch fast path)."""
    w1, b1, w2, b2, w3, b3 = params
    h = x.reshape(x.shape[0], -1).astype(jnp.float32)
    h = jnp.maximum(h @ w1 + b1, 0.0)
    h = jnp.maximum(h @ w2 + b2, 0.0)
    return h @ w3 + b3


def neural_network_forward(x, params, *, impl="auto", tile_r_max=512,
                           tile_c=512, small_batch_threshold=4096):
    """x: any shape (B, ...) — flattened to (B, 1) like nn.Flatten().
    Returns (B, 1) f32 logits.

    impl: "auto" (XLA below small_batch_threshold, Pallas above),
          "pallas" (force kernel), "xla" (force fused-XLA path)."""
    assert tile_c % 128 == 0, "lane tile must be a multiple of 128"
    assert tile_r_max % 8 == 0, "sublane tile must be a multiple of 8"

    b = x.shape[0]
    x2d = x.reshape(b, -1).astype(jnp.float32)                 # Flatten -> (B, F)
    assert x2d.shape[1] == 1, "Linear(1, 2) expects exactly one flattened feature"

    if impl == "xla" or (impl == "auto" and b < small_batch_threshold):
        return reference_forward(x2d, params)

    w1, b1, w2, b2, w3, b3 = params
    # Pack all 13 parameter scalars into one small SMEM vector.
    pvec = jnp.concatenate([
        w1.reshape(-1), b1.reshape(-1),          # p[0:2], p[2:4]
        w2.reshape(-1), b2.reshape(-1),          # p[4:8], p[8:10]
        w3.reshape(-1), b3.reshape(-1),          # p[10:12], p[12]
    ]).astype(jnp.float32)

    # --- 2-D batch slab: batch on sublanes AND lanes -----------------------
    xf = x2d.reshape(-1)                                       # (B,)  free bitcast
    c = tile_c if b >= tile_c else _round_up(b, 128)           # lanes, mult of 128
    b_pad = _round_up(b, c)                                    # pad only to lane width
    if b_pad != b:
        xf = jnp.pad(xf, (0, b_pad - b))                       # < c extra elements
    r = b_pad // c
    xs = xf.reshape(r, c)                                      # row-major bitcast

    # Row tile: blocks up to (tile_r_max, c) f32 (~1 MiB), >=2 grid steps when
    # there is enough work so v7x's two TensorCores both engage.  Ragged tails
    # are handled by a partial final block (OOB writes are masked by Pallas).
    if r <= 8:
        tile_r = r                                             # single full-dim block
    else:
        tile_r = min(tile_r_max, _round_up(pl.cdiv(r, 2), 8))  # multiple of 8
    grid = (pl.cdiv(r, tile_r),)

    out = pl.pallas_call(
        mlp_kernel,
        out_shape=jax.ShapeDtypeStruct((r, c), jnp.float32),
        grid=grid,
        in_specs=[
            pl.BlockSpec(memory_space=pltpu.MemorySpace.SMEM),     # packed params
            pl.BlockSpec((tile_r, c), lambda i: (i, 0)),           # activations
        ],
        out_specs=pl.BlockSpec((tile_r, c), lambda i: (i, 0)),
        compiler_params=pltpu.CompilerParams(
            dimension_semantics=("parallel",)),                    # 2x TC on v7x
    )(pvec, xs)

    return out.reshape(-1)[:b].reshape(b, 1)                   # (B, 1)


def init_params(key):
    """Deterministic init matching the PyTorch module's layer shapes.
    nn.Linear(in, out) weight is (out, in); we store the transpose (in, out)."""
    ks = jax.random.split(key, 6)

    def linear(kw, kb, fan_in, fan_out):
        bound = 1.0 / jnp.sqrt(fan_in)
        w = jax.random.uniform(kw, (fan_in, fan_out), jnp.float32, -bound, bound)
        bias = jax.random.uniform(kb, (1, fan_out), jnp.float32, -bound, bound)
        return w, bias

    w1, b1 = linear(ks[0], ks[1], 1, 2)   # Linear(1, 2)
    w2, b2 = linear(ks[2], ks[3], 2, 2)   # Linear(2, 2)
    w3, b3 = linear(ks[4], ks[5], 2, 1)   # Linear(2, 1)
    return (w1, b1, w2, b2, w3, b3)


if __name__ == "__main__":
    key = jax.random.PRNGKey(0)
    k_param, k_x1, k_x2, k_x3 = jax.random.split(key, 4)

    params = init_params(k_param)

    # Case 1: the spec's tiny batch — Flatten((8,1,1)) -> (8, 1).
    # Force the Pallas path so the kernel itself is exercised.
    x_small = jax.random.normal(k_x1, (8, 1, 1), dtype=jnp.float32)
    out_small = jax.block_until_ready(
        neural_network_forward(x_small, params, impl="pallas"))
    ref_small = reference_forward(x_small, params)
    assert out_small.shape == (8, 1)
    assert jnp.allclose(out_small, ref_small, atol=1e-5, rtol=1e-5)

    # Case 2: lane-pad path (B=300 -> c=384 lanes, single block).
    x_med = jax.random.normal(k_x2, (300, 1), dtype=jnp.float32)
    out_med = jax.block_until_ready(
        neural_network_forward(x_med, params, impl="pallas"))
    ref_med = reference_forward(x_med, params)
    assert out_med.shape == (300, 1)
    assert jnp.allclose(out_med, ref_med, atol=1e-5, rtol=1e-5)

    # Case 3: multi-block grid + partial final block + auto dispatch
    # (B=5000 -> slab (10, 512), tile_r=8, grid=(2,), 2nd block partial).
    x_big = jax.random.normal(k_x3, (5000, 1), dtype=jnp.float32)
    out_big = jax.block_until_ready(
        neural_network_forward(x_big, params, impl="auto"))
    ref_big = reference_forward(x_big, params)
    assert out_big.shape == (5000, 1)
    assert jnp.allclose(out_big, ref_big, atol=1e-5, rtol=1e-5)

    print("KERNEL_OK")
</pallas_src>

<mosaic_0001>
module attributes {stable_mosaic.version = 11 : i64} {
  func.func @mlp_kernel(%arg0: i32, %arg1: memref<13xf32, #tpu.memory_space<smem>>, %arg2: memref<1x128xf32, #tpu.memory_space<vmem>>, %arg3: memref<1x128xf32, #tpu.memory_space<vmem>>) attributes {dimension_semantics = [#tpu.dimension_semantics<parallel>], iteration_bounds = array<i64: 1>, scalar_prefetch = 0 : i64, scratch_operands = 0 : i64, tpu.core_type = #tpu.core_type<tc>, window_params = [{transform_indices = @transform_0, window_bounds = array<i64: 13>}, {transform_indices = @transform_1, window_bounds = array<i64: 1, 128>}, {transform_indices = @transform_2, window_bounds = array<i64: 1, 128>}]} {
    %c0 = arith.constant 0 : index
    %0 = memref.load %arg1[%c0] : memref<13xf32, #tpu.memory_space<smem>>
    %c1 = arith.constant 1 : index
    %1 = memref.load %arg1[%c1] : memref<13xf32, #tpu.memory_space<smem>>
    %c2 = arith.constant 2 : index
    %2 = memref.load %arg1[%c2] : memref<13xf32, #tpu.memory_space<smem>>
    %c3 = arith.constant 3 : index
    %3 = memref.load %arg1[%c3] : memref<13xf32, #tpu.memory_space<smem>>
    %c4 = arith.constant 4 : index
    %4 = memref.load %arg1[%c4] : memref<13xf32, #tpu.memory_space<smem>>
    %c5 = arith.constant 5 : index
    %5 = memref.load %arg1[%c5] : memref<13xf32, #tpu.memory_space<smem>>
    %c6 = arith.constant 6 : index
    %6 = memref.load %arg1[%c6] : memref<13xf32, #tpu.memory_space<smem>>
    %c7 = arith.constant 7 : index
    %7 = memref.load %arg1[%c7] : memref<13xf32, #tpu.memory_space<smem>>
    %c8 = arith.constant 8 : index
    %8 = memref.load %arg1[%c8] : memref<13xf32, #tpu.memory_space<smem>>
    %c9 = arith.constant 9 : index
    %9 = memref.load %arg1[%c9] : memref<13xf32, #tpu.memory_space<smem>>
    %c10 = arith.constant 10 : index
    %10 = memref.load %arg1[%c10] : memref<13xf32, #tpu.memory_space<smem>>
    %c11 = arith.constant 11 : index
    %11 = memref.load %arg1[%c11] : memref<13xf32, #tpu.memory_space<smem>>
    %c12 = arith.constant 12 : index
    %12 = memref.load %arg1[%c12] : memref<13xf32, #tpu.memory_space<smem>>
    %c0_0 = arith.constant 0 : index
    %c0_1 = arith.constant 0 : index
    %13 = vector.load %arg2[%c0_0, %c0_1] : memref<1x128xf32, #tpu.memory_space<vmem>>, vector<1x128xf32>
    %14 = vector.broadcast %0 : f32 to vector<1x128xf32>
    %15 = arith.mulf %13, %14 : vector<1x128xf32>
    %16 = vector.broadcast %2 : f32 to vector<1x128xf32>
    %17 = arith.addf %15, %16 : vector<1x128xf32>
    %cst = arith.constant 0.000000e+00 : f32
    %18 = vector.broadcast %cst : f32 to vector<1x128xf32>
    %19 = arith.maximumf %17, %18 : vector<1x128xf32>
    %20 = vector.broadcast %1 : f32 to vector<1x128xf32>
    %21 = arith.mulf %13, %20 : vector<1x128xf32>
    %22 = vector.broadcast %3 : f32 to vector<1x128xf32>
    %23 = arith.addf %21, %22 : vector<1x128xf32>
    %cst_2 = arith.constant 0.000000e+00 : f32
    %24 = vector.broadcast %cst_2 : f32 to vector<1x128xf32>
    %25 = arith.maximumf %23, %24 : vector<1x128xf32>
    %26 = vector.broadcast %4 : f32 to vector<1x128xf32>
    %27 = arith.mulf %19, %26 : vector<1x128xf32>
    %28 = vector.broadcast %6 : f32 to vector<1x128xf32>
    %29 = arith.mulf %25, %28 : vector<1x128xf32>
    %30 = arith.addf %27, %29 : vector<1x128xf32>
    %31 = vector.broadcast %8 : f32 to vector<1x128xf32>
    %32 = arith.addf %30, %31 : vector<1x128xf32>
    %cst_3 = arith.constant 0.000000e+00 : f32
    %33 = vector.broadcast %cst_3 : f32 to vector<1x128xf32>
    %34 = arith.maximumf %32, %33 : vector<1x128xf32>
    %35 = vector.broadcast %5 : f32 to vector<1x128xf32>
    %36 = arith.mulf %19, %35 : vector<1x128xf32>
    %37 = vector.broadcast %7 : f32 to vector<1x128xf32>
    %38 = arith.mulf %25, %37 : vector<1x128xf32>
    %39 = arith.addf %36, %38 : vector<1x128xf32>
    %40 = vector.broadcast %9 : f32 to vector<1x128xf32>
    %41 = arith.addf %39, %40 : vector<1x128xf32>
    %cst_4 = arith.constant 0.000000e+00 : f32
    %42 = vector.broadcast %cst_4 : f32 to vector<1x128xf32>
    %43 = arith.maximumf %41, %42 : vector<1x128xf32>
    %44 = vector.broadcast %10 : f32 to vector<1x128xf32>
    %45 = arith.mulf %34, %44 : vector<1x128xf32>
    %46 = vector.broadcast %11 : f32 to vector<1x128xf32>
    %47 = arith.mulf %43, %46 : vector<1x128xf32>
    %48 = arith.addf %45, %47 : vector<1x128xf32>
    %49 = vector.broadcast %12 : f32 to vector<1x128xf32>
    %50 = arith.addf %48, %49 : vector<1x128xf32>
    %c0_5 = arith.constant 0 : index
    %c0_6 = arith.constant 0 : index
    %51 = vector.load %arg3[%c0_5, %c0_6] : memref<1x128xf32, #tpu.memory_space<vmem>>, vector<1x128xf32>
    tpu.vector_store %arg3[%c0_5, %c0_6], %50 {strides = array<i32>} : memref<1x128xf32, #tpu.memory_space<vmem>>, vector<1x128xf32>,
    return
  }
  func.func @transform_0(%arg0: i32) -> i32 {
    %c0_i32 = arith.constant 0 : i32
    %c0_i32_0 = arith.constant 0 : i32
    return %c0_i32 : i32
  }
  func.func @transform_1(%arg0: i32) -> (i32, i32) {
    %c0_i32 = arith.constant 0 : i32
    %c0_i32_0 = arith.constant 0 : i32
    return %arg0, %c0_i32 : i32, i32
  }
  func.func @transform_2(%arg0: i32) -> (i32, i32) {
    %c0_i32 = arith.constant 0 : i32
    %c0_i32_0 = arith.constant 0 : i32
    return %arg0, %c0_i32 : i32, i32
  }
}

</mosaic_0001>

<llo_original>
// kernel: tpu_custom_call.1
$region0: #{tpu_custom_call.1}
  #allocation0 [shape = 'u32[]', space=smem, size = 0x4, offset = 0x4, fixed_abs, tag = 'smem constant byte address 0x4 - core index']
  #allocation1 [shape = 'u32[144,128]{1,0:T(1,128)}', space=vmem, size = 0x12000, scoped, tag = 'internal scratch']
  %s0 = inlined_call_operand.hbm [shape: f32[13], index: 0, kind: input, shape index: {}]
  %s1 = inlined_call_operand.vmem [shape: f32[1,128], index: 1, kind: input, shape index: {}]
  %s2 = inlined_call_operand.hbm [shape: f32[1,128], index: 2, kind: output, shape index: {}]
  %s3 = sld [smem:[#allocation0]]
  $region22: #{tpu_custom_call.1} parent=0
    _
  %s5 = ssub.s32 1, %s3
  %s6 = scalar_select 0, %s5, %s3
  $region1: #{tpu_custom_call.1} parent=0
    #allocation2 [shape = 'u8[512]{0}', space=smem, size = 0x200, scoped, tag = 'input window, operand 0, single buffered']
    #allocation3 [shape = 's32[1]{0}', space=sflag, size = 0x4, scoped, tag = 'scoped memory for tpu_custom_call.1']
    #allocation4 [shape = 's32[1]{0}', space=sflag, size = 0x4, scoped, tag = 'scoped memory for tpu_custom_call.1']
    #allocation5 [shape = 'u8[512]{0}', space=vmem, size = 0x400, scoped, tag = 'output window, operand 0, single buffered']
    %7 = vsyncpa [#allocation4], 0
    %8 = vsyncpa [#allocation3], 0
    // Predicated region
    $region2: #{tpu_custom_call.1} parent=1 // pred_check
      _
    $region3: #{tpu_custom_call.1} parent=1 // pred_check_branch
      %10 = sbr.rel (0) target = $region5
    $region4: #{tpu_custom_call.1} parent=1 // pred_region
      %s12 = ssub.s32 16, 16
      %13 = vsyncadd [#allocation4], %s12
      %16 = dma.hbm_to_smem %s0, 16, [#allocation2], [#allocation4]
    $region5: #{tpu_custom_call.1} parent=1 // pred_fallthru
      _
    // Predicated region
    $region6: #{tpu_custom_call.1} parent=1 // pred_check
      _
    $region7: #{tpu_custom_call.1} parent=1 // pred_check_branch
      %18 = sbr.rel (0) target = $region9
    $region8: #{tpu_custom_call.1} parent=1 // pred_region
      _
    $region9: #{tpu_custom_call.1} parent=1 // pred_fallthru
      _
    // Predicated region
    $region10: #{tpu_custom_call.1} parent=1 // pred_check
      _
    $region11: #{tpu_custom_call.1} parent=1 // pred_check_branch
      %20 = sbr.rel (0) target = $region13
    $region12: #{tpu_custom_call.1} parent=1 // pred_region
      %21 = dma.done [#allocation4], 16
    $region13: #{tpu_custom_call.1} parent=1 // pred_fallthru
      _
    %22 = sfence
    %s23 = sld [smem:[#allocation2]]
    %s24 = sld [smem:[#allocation2 + $0x1]]
    %s25 = sld [smem:[#allocation2 + $0x2]]
    %s26 = sld [smem:[#allocation2 + $0x3]]
    %s27 = sld [smem:[#allocation2 + $0x4]]
    %s28 = sld [smem:[#allocation2 + $0x5]]
    %s29 = sld [smem:[#allocation2 + $0x6]]
    %s30 = sld [smem:[#allocation2 + $0x7]]
    %s31 = sld [smem:[#allocation2 + $0x8]]
    %s32 = sld [smem:[#allocation2 + $0x9]]
    %s33 = sld [smem:[#allocation2 + $0xa]]
    %s34 = sld [smem:[#allocation2 + $0xb]]
    %s35 = sld [smem:[#allocation2 + $0xc]]
    %v36 = vld [vmem:[%s1] sm:$0x1]
    %v37 = vstv %s23
    %v38 = vmul.f32 %v36, %v37
    %v39 = vstv %s25
    %v40 = vadd.f32 %v38, %v39
    %v41 = vmax.f32 %v40, 0.0
    %v42 = vstv %s24
    %v43 = vmul.f32 %v36, %v42
    %v44 = vstv %s26
    %v45 = vadd.f32 %v43, %v44
    %v46 = vmax.f32 %v45, 0.0
    %v47 = vstv %s27
    %v48 = vmul.f32 %v41, %v47
    %v49 = vstv %s29
    %v50 = vmul.f32 %v46, %v49
    %v51 = vadd.f32 %v48, %v50
    %v52 = vstv %s31
    %v53 = vadd.f32 %v51, %v52
    %v54 = vmax.f32 %v53, 0.0
    %v55 = vstv %s28
    %v56 = vmul.f32 %v41, %v55
    %v57 = vstv %s30
    %v58 = vmul.f32 %v46, %v57
    %v59 = vadd.f32 %v56, %v58
    %v60 = vstv %s32
    %v61 = vadd.f32 %v59, %v60
    %v62 = vmax.f32 %v61, 0.0
    %v63 = vstv %s33
    %v64 = vmul.f32 %v54, %v63
    %v65 = vstv %s34
    %v66 = vmul.f32 %v62, %v65
    %v67 = vadd.f32 %v64, %v66
    %v68 = vstv %s35
    %v69 = vadd.f32 %v67, %v68
    %70 = vst [vmem:[#allocation5] sm:$0x1] %v69
    // Predicated region
    $region14: #{tpu_custom_call.1} parent=1 // pred_check
      _
    $region15: #{tpu_custom_call.1} parent=1 // pred_check_branch
      %72 = sbr.rel (0) target = $region17
    $region16: #{tpu_custom_call.1} parent=1 // pred_region
      %s74 = ssub.s32 16, 16
      %75 = vsyncadd [#allocation3], %s74
      %s77 = sshll.u32 [#allocation5], 4
      %s78 = int_to_ptr.vmem [resolvable:$true] %s77
      %80 = dma.vmem_to_hbm [thread:$0]  %s78, 16, %s2, [#allocation3]
    $region17: #{tpu_custom_call.1} parent=1 // pred_fallthru
      _
    // Predicated region
    $region18: #{tpu_custom_call.1} parent=1 // pred_check
      _
    $region19: #{tpu_custom_call.1} parent=1 // pred_check_branch
      %82 = sbr.rel (0) target = $region21
    $region20: #{tpu_custom_call.1} parent=1 // pred_region
      %83 = dma.done [#allocation3], 16
    $region21: #{tpu_custom_call.1} parent=1 // pred_fallthru
      _
    %84 = vsyncpa [#allocation3], 1
    %85 = vsyncpa [#allocation4], 1

</llo_original>
